<compile_context>
chip_gen: v5e
topology: v5e:2x2
jax: 0.10.0
libtpu: 0.0.40
codegen_flags: <defaults>
</compile_context>

<pallas_src>
import functools

import jax
import jax.numpy as jnp
from jax import lax
from jax.experimental import pallas as pl
from jax.experimental.pallas import tpu as pltpu


# ---------------------------------------------------------------------------
# Kernel
# ---------------------------------------------------------------------------

def _cab_kernel(gamma_ref, xt_ref, xf_ref, o_ref, *, compute_dtype, approx_recip):
    """One (batch, channel-slab) step of ChannelAttentionBlock.

    gamma_ref : (1,)         SMEM scalar
    xt_ref    : (1, ct, Np)  VMEM  -- channel slab this step produces (input dtype)
    xf_ref    : (1, C,  Np)  VMEM  -- full channel matrix (already matmul dtype)
    o_ref     : (1, ct, Np)  VMEM
    """
    xt = xt_ref[0]                                     # (ct, Np) input dtype
    xf = xf_ref[0]                                     # (C,  Np) compute dtype (wrapper-cast)
    xt_c = xt.astype(compute_dtype)

    # affinity[i, j] = sum_n xt[i, n] * xf[j, n]   (contract on N; no transpose op)
    aff = lax.dot_general(xt_c, xf, (((1,), (1,)), ((), ())),
                          preferred_element_type=jnp.float32)       # (ct, C) f32

    # softmax(rowmax(aff) - aff) == softmax(-aff); the row-min keeps max exponent 0.
    m = jnp.min(aff, axis=-1, keepdims=True)
    e = jnp.exp(m - aff)
    denom = jnp.sum(e, axis=-1, keepdims=True)
    p = e * pl.reciprocal(denom, approx=approx_recip)               # (ct, C) f32

    # weights[i, n] = sum_j p[i, j] * xf[j, n]
    w = jnp.dot(p.astype(compute_dtype), xf,
                preferred_element_type=jnp.float32)                 # (ct, Np) f32

    o_ref[0] = (gamma_ref[0] * w + xt.astype(jnp.float32)).astype(o_ref.dtype)


# ---------------------------------------------------------------------------
# Wrapper
# ---------------------------------------------------------------------------

def _round_up(v, m):
    return (v + m - 1) // m * m


def _physical_vmem_bytes():
    try:
        return int(pltpu.get_tpu_info().vmem_capacity_bytes)
    except Exception:
        return 64 << 20      # assume v7x (most VMEM-constrained generation)


def _working_set_bytes(C, c_tile, n_pad, x_bytes, xf_bytes, out_bytes, xf_bufs):
    xf_blk = xf_bufs * C * n_pad * xf_bytes                  # full-matrix operand
    io_blk = 2 * c_tile * n_pad * (x_bytes + out_bytes)      # double-buffered slab in/out
    temps = 2 * c_tile * C * 4 + c_tile * n_pad * 4          # aff/e + w (f32)
    return xf_blk + io_blk + temps + (1 << 20)               # +1 MiB slack


def channel_attention_block(x, gamma, *, compute_dtype=None, c_tile=None):
    """ChannelAttentionBlock.forward.  x: (B, C, H, W) NCHW, gamma: (1,)."""
    B, C, H, W = x.shape
    N = H * W
    n_pad = _round_up(N, 128)            # lane-dense last dim (exact with zero padding)

    x_dtype = jnp.dtype(x.dtype)
    if compute_dtype is None:
        # Native-rate MXU operands by default; f32 accumulation is kept regardless.
        compute_dtype = jnp.bfloat16 if x_dtype == jnp.dtype(jnp.float32) else x_dtype
    compute_dtype = jnp.dtype(compute_dtype)
    approx_recip = compute_dtype != jnp.dtype(jnp.float32)   # exact recip on the f32 path

    x_bytes = x_dtype.itemsize
    xf_bytes = compute_dtype.itemsize
    out_bytes = x_dtype.itemsize

    # ---- generation-aware VMEM budgeting -----------------------------------
    phys = _physical_vmem_bytes()
    budget = phys // 2

    def ws(ct, bufs):
        return _working_set_bytes(C, ct, n_pad, x_bytes, xf_bytes, out_bytes, bufs)

    if c_tile is not None:
        assert C % c_tile == 0, "c_tile must divide C"
        candidates = [c_tile]
    else:
        candidates = [t for t in (512, 256, 128, 64, 32, 16, 8) if C % t == 0] or [C]

    c_tile_sel, xf_bufs = None, 2
    for bufs in (2, 1):        # prefer double-buffered xf; drop to 1 buffer if VMEM-bound
        for t in candidates:
            if ws(t, bufs) <= budget:
                c_tile_sel, xf_bufs = t, bufs
                break
        if c_tile_sel is not None:
            break
    if c_tile_sel is None:
        # Best effort for very large N: smallest slab, single xf buffer.
        # Going lower would need a two-pass N-tiled restructure of the Gram matrix.
        c_tile_sel, xf_bufs = candidates[-1], 1
    c_tile = c_tile_sel
    n_ct = C // c_tile

    est = ws(c_tile, xf_bufs)
    vmem_limit = int(min(phys - (8 << 20), max(32 << 20, est + est // 2)))
    vmem_limit = max(vmem_limit, 16 << 20)

    # ---- operand preparation -------------------------------------------------
    x_flat = x.reshape(B, C, N)
    if n_pad != N:
        x_flat = jnp.pad(x_flat, ((0, 0), (0, 0), (0, n_pad - N)))
    # Cast the dominant full-matrix operand ONCE in the wrapper (halves its DMA
    # bytes and VMEM footprint on the bf16 path); the slab keeps the input dtype
    # so the residual add is exact.
    xf_flat = x_flat if compute_dtype == x_dtype else x_flat.astype(compute_dtype)
    gamma = gamma.reshape(1).astype(jnp.float32)

    xf_spec_kwargs = {} if xf_bufs == 2 else {"pipeline_mode": pl.Buffered(1)}
    xf_spec = pl.BlockSpec((1, C, n_pad), lambda b, i: (b, 0, 0), **xf_spec_kwargs)

    cost = pl.CostEstimate(
        flops=4 * B * C * C * n_pad,                 # two (C,C,N) matmuls per batch item
        transcendentals=B * C * C,                   # exp of the affinity matrix
        bytes_accessed=B * C * n_pad * (x_bytes + xf_bytes + out_bytes),
    )

    out = pl.pallas_call(
        functools.partial(_cab_kernel, compute_dtype=compute_dtype,
                          approx_recip=approx_recip),
        grid=(B, n_ct),
        in_specs=[
            pl.BlockSpec(memory_space=pltpu.MemorySpace.SMEM),           # gamma scalar
            pl.BlockSpec((1, c_tile, n_pad), lambda b, i: (b, i, 0)),    # channel slab
            xf_spec,                                                      # full matrix per batch
        ],
        out_specs=pl.BlockSpec((1, c_tile, n_pad), lambda b, i: (b, i, 0)),
        out_shape=jax.ShapeDtypeStruct((B, C, n_pad), x.dtype),
        compiler_params=pltpu.CompilerParams(
            # Megacore split over batch (not the slab axis) when B >= 2 so the
            # full-matrix fetch is not duplicated per core on v7x.
            dimension_semantics=(("parallel", "arbitrary") if B >= 2
                                 else ("parallel", "parallel")),
            vmem_limit_bytes=vmem_limit,
        ),
        cost_estimate=cost,
    )(gamma, x_flat, xf_flat)

    if n_pad != N:
        out = out[:, :, :N]
    return out.reshape(B, C, H, W)


# ---------------------------------------------------------------------------
# Pure-JAX reference (for correctness check)
# ---------------------------------------------------------------------------

def channel_attention_block_ref(x, gamma):
    B, C, H, W = x.shape
    q = x.reshape(B, C, H * W).astype(jnp.float32)
    aff = jnp.einsum("bcn,bdn->bcd", q, q, precision=lax.Precision.HIGHEST)
    aff_new = jnp.max(aff, axis=-1, keepdims=True) - aff
    p = jax.nn.softmax(aff_new, axis=-1)
    w = jnp.einsum("bcd,bdn->bcn", p, q, precision=lax.Precision.HIGHEST)
    out = gamma.reshape(()) * w + q
    return out.reshape(B, C, H, W).astype(x.dtype)


# ---------------------------------------------------------------------------
# Demo
# ---------------------------------------------------------------------------

if __name__ == "__main__":
    key = jax.random.PRNGKey(0)
    kx, kx2 = jax.random.split(key)

    B, C, H, W = 2, 32, 16, 16
    # Moderate-magnitude inputs keep the channel softmax numerically temperate.
    x = 0.25 * jax.random.normal(kx, (B, C, H, W), jnp.float32)
    # torch init is gamma = 0 (out == x); use a non-trivial value so the full
    # attention path is actually exercised.
    gamma = jnp.array([0.7], jnp.float32)

    ref = channel_attention_block_ref(x, gamma)

    # 1) Exact path: f32 MXU operands, exact reciprocal; c_tile=8 exercises the
    #    multi-slab grid (n_ct = 4).
    out_f32 = channel_attention_block(x, gamma, compute_dtype=jnp.float32, c_tile=8)
    jax.block_until_ready(out_f32)
    assert out_f32.shape == (B, C, H, W)
    err_f32 = float(jnp.max(jnp.abs(out_f32 - ref)))
    assert bool(jnp.allclose(out_f32, ref, rtol=2e-3, atol=2e-3)), err_f32

    # 2) Default path: bf16 MXU operands (wrapper-cast full matrix), f32 accumulation.
    out_bf16 = channel_attention_block(x, gamma)
    jax.block_until_ready(out_bf16)
    assert out_bf16.shape == (B, C, H, W)
    err_bf16 = float(jnp.max(jnp.abs(out_bf16 - ref)))
    assert bool(jnp.allclose(out_bf16, ref, rtol=2e-2, atol=2e-2)), err_bf16

    # 3) Non-multiple-of-128 spatial size exercises the lane-padding path (N=100->128).
    Hs, Ws = 10, 10
    xs = 0.25 * jax.random.normal(kx2, (B, C, Hs, Ws), jnp.float32)
    ref_s = channel_attention_block_ref(xs, gamma)
    out_s = channel_attention_block(xs, gamma, compute_dtype=jnp.float32)
    jax.block_until_ready(out_s)
    assert out_s.shape == (B, C, Hs, Ws)
    err_s = float(jnp.max(jnp.abs(out_s - ref_s)))
    assert bool(jnp.allclose(out_s, ref_s, rtol=2e-3, atol=2e-3)), err_s

    print("KERNEL_OK")
</pallas_src>

<mosaic_0001>
module attributes {stable_mosaic.version = 11 : i64} {
  func.func @_cab_kernel(%arg0: i32, %arg1: i32, %arg2: memref<1xf32, #tpu.memory_space<smem>>, %arg3: memref<1x8x256xf32, #tpu.memory_space<vmem>>, %arg4: memref<1x32x256xf32, #tpu.memory_space<vmem>>, %arg5: memref<1x8x256xf32, #tpu.memory_space<vmem>>) attributes {dimension_semantics = [#tpu.dimension_semantics<parallel>, #tpu.dimension_semantics<arbitrary>], iteration_bounds = array<i64: 2, 4>, scalar_prefetch = 0 : i64, scratch_operands = 0 : i64, tpu.core_type = #tpu.core_type<tc>, window_params = [{transform_indices = @transform_0, window_bounds = array<i64: 1>}, {transform_indices = @transform_1, window_bounds = array<i64: 1, 8, 256>}, {transform_indices = @transform_2, window_bounds = array<i64: 1, 32, 256>}, {transform_indices = @transform_3, window_bounds = array<i64: 1, 8, 256>}]} {
    %c0 = arith.constant 0 : index
    %c0_0 = arith.constant 0 : index
    %c0_1 = arith.constant 0 : index
    %0 = vector.load %arg3[%c0, %c0_0, %c0_1] : memref<1x8x256xf32, #tpu.memory_space<vmem>>, vector<1x8x256xf32>
    %1 = vector.shape_cast %0 : vector<1x8x256xf32> to vector<8x256xf32>
    %c0_2 = arith.constant 0 : index
    %c0_3 = arith.constant 0 : index
    %c0_4 = arith.constant 0 : index
    %2 = vector.load %arg4[%c0_2, %c0_3, %c0_4] : memref<1x32x256xf32, #tpu.memory_space<vmem>>, vector<1x32x256xf32>
    %3 = vector.shape_cast %2 : vector<1x32x256xf32> to vector<32x256xf32>
    %cst = arith.constant dense<0.000000e+00> : vector<8x32xf32>
    %4 = tpu.matmul %1, %3, %cst {dimension_numbers = #tpu.dot_dimension_numbers<[1], [1], [0], [0], [0, 0, 1, 0], [], []>} : vector<8x256xf32>, vector<32x256xf32>, vector<8x32xf32> -> vector<8x32xf32>
    %cst_5 = arith.constant dense<0x7F800000> : vector<8xf32>
    %5 = vector.multi_reduction <minimumf>, %4, %cst_5 [1] : vector<8x32xf32> to vector<8xf32>
    %6 = vector.shape_cast %5 : vector<8xf32> to vector<8x1xf32>
    %7 = vector.broadcast %6 : vector<8x1xf32> to vector<8x32xf32>
    %8 = arith.subf %7, %4 : vector<8x32xf32>
    %9 = math.exp %8 : vector<8x32xf32>
    %cst_6 = arith.constant dense<0.000000e+00> : vector<8xf32>
    %10 = vector.multi_reduction <add>, %9, %cst_6 [1] : vector<8x32xf32> to vector<8xf32>
    %11 = vector.shape_cast %10 : vector<8xf32> to vector<8x1xf32>
    %12 = tpu.reciprocal %11 : vector<8x1xf32> -> vector<8x1xf32>
    %13 = vector.broadcast %12 : vector<8x1xf32> to vector<8x32xf32>
    %14 = arith.mulf %9, %13 : vector<8x32xf32>
    %cst_7 = arith.constant dense<0.000000e+00> : vector<8x256xf32>
    %15 = tpu.matmul %14, %3, %cst_7 {dimension_numbers = #tpu.dot_dimension_numbers<[1], [0], [0], [1], [0, 0, 1, 1], [], []>} : vector<8x32xf32>, vector<32x256xf32>, vector<8x256xf32> -> vector<8x256xf32>
    %c0_8 = arith.constant 0 : index
    %16 = memref.load %arg2[%c0_8] : memref<1xf32, #tpu.memory_space<smem>>
    %17 = vector.broadcast %16 : f32 to vector<8x256xf32>
    %18 = arith.mulf %17, %15 : vector<8x256xf32>
    %19 = arith.addf %18, %1 : vector<8x256xf32>
    %c0_9 = arith.constant 0 : index
    %c0_10 = arith.constant 0 : index
    %c0_11 = arith.constant 0 : index
    %20 = vector.load %arg5[%c0_9, %c0_10, %c0_11] : memref<1x8x256xf32, #tpu.memory_space<vmem>>, vector<1x8x256xf32>
    %21 = vector.shape_cast %20 : vector<1x8x256xf32> to vector<8x256xf32>
    %22 = vector.shape_cast %19 : vector<8x256xf32> to vector<1x8x256xf32>
    tpu.vector_store %arg5[%c0_9, %c0_10, %c0_11], %22 {strides = array<i32>} : memref<1x8x256xf32, #tpu.memory_space<vmem>>, vector<1x8x256xf32>,
    return
  }
  func.func @transform_0(%arg0: i32, %arg1: i32) -> i32 {
    %c0_i32 = arith.constant 0 : i32
    %c0_i32_0 = arith.constant 0 : i32
    return %c0_i32 : i32
  }
  func.func @transform_1(%arg0: i32, %arg1: i32) -> (i32, i32, i32) {
    %c0_i32 = arith.constant 0 : i32
    %c0_i32_0 = arith.constant 0 : i32
    return %arg0, %arg1, %c0_i32 : i32, i32, i32
  }
  func.func @transform_2(%arg0: i32, %arg1: i32) -> (i32, i32, i32) {
    %c0_i32 = arith.constant 0 : i32
    %c0_i32_0 = arith.constant 0 : i32
    %c0_i32_1 = arith.constant 0 : i32
    return %arg0, %c0_i32, %c0_i32_0 : i32, i32, i32
  }
  func.func @transform_3(%arg0: i32, %arg1: i32) -> (i32, i32, i32) {
    %c0_i32 = arith.constant 0 : i32
    %c0_i32_0 = arith.constant 0 : i32
    return %arg0, %arg1, %c0_i32 : i32, i32, i32
  }
}

</mosaic_0001>

<llo_original>
// kernel: tpu_custom_call.1
$region0: #{tpu_custom_call.1}
  #allocation0 [shape = 'u32[]', space=smem, size = 0x4, offset = 0x4, fixed_abs, tag = 'smem constant byte address 0x4 - core index']
  #allocation1 [shape = 'u32[72,128]{1,0:T(1,128)}', space=vmem, size = 0x9000, scoped, tag = 'internal scratch']
  #allocation2 [shape = 'f32[1]{0:T(128)S(6)}', space=smem, size = 0x200, scoped, tag = 'scoped memory for tpu_custom_call.1']
  %s0 = inlined_call_operand.<no memory space> [shape: f32[1], index: 0, kind: input, shape index: {}]
  %s1 = inlined_call_operand.hbm [shape: f32[2,32,256], index: 1, kind: input, shape index: {}]
  %s2 = inlined_call_operand.hbm [shape: f32[2,32,256], index: 2, kind: input, shape index: {}]
  %s3 = inlined_call_operand.hbm [shape: f32[2,32,256], index: 3, kind: output, shape index: {}]
  %s4 = sld [smem:[#allocation0]]
  $region53: #{tpu_custom_call.1} parent=0
    _
  %s6 = ssub.s32 1, %s4
  %s7 = scalar_select 0, %s6, %s4
  %8 = sst [smem:[#allocation2]] %s0
  $region1: #{tpu_custom_call.1} parent=0
    #allocation3 [shape = 'u8[16384]{0}', space=vmem, size = 0x4000, scoped, tag = 'input window, operand 1']
    #allocation4 [shape = 's32[2]{0}', space=sflag, size = 0x8, scoped, tag = 'scoped memory for tpu_custom_call.1']
    #allocation5 [shape = 's32[2]{0}', space=sflag, size = 0x8, scoped, tag = 'scoped memory for tpu_custom_call.1']
    #allocation6 [shape = 'u8[65536]{0}', space=vmem, size = 0x10000, scoped, tag = 'input window, operand 2']
    #allocation7 [shape = 's32[2]{0}', space=sflag, size = 0x8, scoped, tag = 'scoped memory for tpu_custom_call.1']
    #allocation8 [shape = 'u8[16384]{0}', space=vmem, size = 0x4000, scoped, tag = 'output window, operand 0']
    %9 = vsyncpa [#allocation4], 0
    %s10 = scalar_lea.sflag [#allocation4], 1
    %11 = vsyncpa %s10, 0
    %12 = vsyncpa [#allocation7], 0
    %s13 = scalar_lea.sflag [#allocation7], 1
    %14 = vsyncpa %s13, 0
    %15 = vsyncpa [#allocation5], 0
    %s16 = scalar_lea.sflag [#allocation5], 1
    %17 = vsyncpa %s16, 0
    loop: start=0, step=1, limit=10
    $region2: #{tpu_custom_call.1} parent=1 // loop_pre_header
      _
    $region3: #{tpu_custom_call.1} parent=1 // loop_header
      %s19 = sphi 0, %s23
      %p20 = scmp.ge.s32.totalorder %s19, 10
      %s26 = sphi 0, %s38
      %s27 = sphi 0, %s34
      %s28 = sphi 0, %s26
      %s29 = sphi 0, %s27
      %s30 = sphi 0, %s28
      %s31 = sphi 0, %s29
      %s39 = sphi 0, %s39
      %s41 = sphi 0, %s39
      %s42 = sphi 0, %s41
      %s56 = sphi 0, %s42
      %s64 = sphi 0, %s66
      %s67 = sphi 0, %s64
      %s68 = sphi 0, %s67
      %s84 = sphi 0, %s68
      %s90 = sphi 0, %s92
      %s93 = sphi 0, %s90
      %s94 = sphi 0, %s93
      %s110 = sphi 0, %s94
      %s118 = sphi 0, %s120
      %s121 = sphi 0, %s118
      %s122 = sphi 0, %s121
      %s138 = sphi 0, %s122
    $region4: #{tpu_custom_call.1} parent=1 // loop_header_branch
      %22 = sbr.rel (%p20) target = $region8
    $region5: #{tpu_custom_call.1} parent=1 // loop_body
      %s24 = ssub.s32 %s19, 1
      %s25 = ssub.s32 %s19, 2
      %s32 = sadd.s32 1, %s27
      %p33 = scmp.ge.s32.totalorder %s32, 4
      %s34 = scalar_select %p33, 0, %s32
      %s35 = sadd.s32 1, %s26
      %s36 = scalar_select %p33, %s35, %s26
      %p37 = scmp.ge.s32.totalorder %s36, 2
      %s38 = scalar_select %p37, 0, %s36
      %s40 = sadd.s32 %s39, 1
      %p43 = scmp.eq.s32.totalorder %s19, 7
      %p44 = scmp.ne.s32.totalorder %s39, %s41
      %p45 = scmp.eq.s32.totalorder %s19, 0
      %p46 = por %p44, %p45
      %p47 = scmp.ne.s32.totalorder %s39, %s41
      %p48 = scmp.eq.s32.totalorder %s24, 7
      %p49 = por %p47, %p48
      %p50 = scmp.ne.s32.totalorder %s41, %s42
      %p51 = scmp.eq.s32.totalorder %s24, 0
      %p52 = por %p50, %p51
      %p53 = scmp.ne.s32.totalorder %s41, %s42
      %p54 = scmp.eq.s32.totalorder %s25, 7
      %p55 = por %p53, %p54
      %p57 = scmp.ne.s32.totalorder %s42, %s56
      %p58 = scmp.eq.s32.totalorder %s25, 0
      %p59 = por %p57, %p58
      %s60 = ssub.s32 %s26, %s38
      %s61 = ssub.s32 %s27, %s34
      %s62 = sor.u32 %s60, %s61
      %p63 = scmp.eq.s32.totalorder %s62, 0
      %s65 = sadd.s32 %s64, 1
      %s66 = scalar_select %p63, %s64, %s65
      %p69 = pneg %p63
      %p70 = scmp.eq.s32.totalorder %s19, 7
      %p71 = por %p69, %p70
      %p72 = scmp.ne.s32.totalorder %s64, %s67
      %p73 = scmp.eq.s32.totalorder %s19, 0
      %p74 = por %p72, %p73
      %p75 = scmp.ne.s32.totalorder %s64, %s67
      %p76 = scmp.eq.s32.totalorder %s24, 7
      %p77 = por %p75, %p76
      %p78 = scmp.ne.s32.totalorder %s67, %s68
      %p79 = scmp.eq.s32.totalorder %s24, 0
      %p80 = por %p78, %p79
      %p81 = scmp.ne.s32.totalorder %s67, %s68
      %p82 = scmp.eq.s32.totalorder %s25, 7
      %p83 = por %p81, %p82
      %p85 = scmp.ne.s32.totalorder %s68, %s84
      %p86 = scmp.eq.s32.totalorder %s25, 0
      %p87 = por %p85, %p86
      %s88 = ssub.s32 %s26, %s38
      %p89 = scmp.eq.s32.totalorder %s88, 0
      %s91 = sadd.s32 %s90, 1
      %s92 = scalar_select %p89, %s90, %s91
      %p95 = pneg %p89
      %p96 = scmp.eq.s32.totalorder %s19, 7
      %p97 = por %p95, %p96
      %p98 = scmp.ne.s32.totalorder %s90, %s93
      %p99 = scmp.eq.s32.totalorder %s19, 0
      %p100 = por %p98, %p99
      %p101 = scmp.ne.s32.totalorder %s90, %s93
      %p102 = scmp.eq.s32.totalorder %s24, 7
      %p103 = por %p101, %p102
      %p104 = scmp.ne.s32.totalorder %s93, %s94
      %p105 = scmp.eq.s32.totalorder %s24, 0
      %p106 = por %p104, %p105
      %p107 = scmp.ne.s32.totalorder %s93, %s94
      %p108 = scmp.eq.s32.totalorder %s25, 7
      %p109 = por %p107, %p108
      %p111 = scmp.ne.s32.totalorder %s94, %s110
      %p112 = scmp.eq.s32.totalorder %s25, 0
      %p113 = por %p111, %p112
      %s114 = ssub.s32 %s26, %s38
      %s115 = ssub.s32 %s27, %s34
      %s116 = sor.u32 %s114, %s115
      %p117 = scmp.eq.s32.totalorder %s116, 0
      %s119 = sadd.s32 %s118, 1
      %s120 = scalar_select %p117, %s118, %s119
      %p123 = pneg %p117
      %p124 = scmp.eq.s32.totalorder %s19, 7
      %p125 = por %p123, %p124
      %p126 = scmp.ne.s32.totalorder %s118, %s121
      %p127 = scmp.eq.s32.totalorder %s19, 0
      %p128 = por %p126, %p127
      %p129 = scmp.ne.s32.totalorder %s118, %s121
      %p130 = scmp.eq.s32.totalorder %s24, 7
      %p131 = por %p129, %p130
      %p132 = scmp.ne.s32.totalorder %s121, %s122
      %p133 = scmp.eq.s32.totalorder %s24, 0
      %p134 = por %p132, %p133
      %p135 = scmp.ne.s32.totalorder %s121, %s122
      %p136 = scmp.eq.s32.totalorder %s25, 7
      %p137 = por %p135, %p136
      %p139 = scmp.ne.s32.totalorder %s122, %s138
      %p140 = scmp.eq.s32.totalorder %s25, 0
      %p141 = por %p139, %p140
      %p142 = scmp.le.s32.totalorder 1, %s19
      %p143 = scmp.lt.s32.totalorder %s19, 9
      %p144 = pnand %p142, %p143
      %p145 = pneg %p144
      // Predicated region
      $region9: #{tpu_custom_call.1} parent=5 // pred_check
        _
      $region10: #{tpu_custom_call.1} parent=5 // pred_check_branch
        %147 = sbr.rel (%p144) target = $region12
      $region11: #{tpu_custom_call.1} parent=5 // pred_region
        %s148 = ssub.s32 %s19, 1
        // Predicated region
        $region13: #{tpu_custom_call.1} parent=11 // pred_check
          %p149 = pneg %p52
        $region14: #{tpu_custom_call.1} parent=11 // pred_check_branch
          %151 = sbr.rel (%p149) target = $region16
        $region15: #{tpu_custom_call.1} parent=11 // pred_region
          _
        $region16: #{tpu_custom_call.1} parent=11 // pred_fallthru
          _
      $region12: #{tpu_custom_call.1} parent=5 // pred_fallthru
        _
      %p152 = scmp.lt.s32.totalorder %s19, 8
      // Predicated region
      $region17: #{tpu_custom_call.1} parent=5 // pred_check
        %p153 = pneg %p152
      $region18: #{tpu_custom_call.1} parent=5 // pred_check_branch
        %155 = sbr.rel (%p153) target = $region20
      $region19: #{tpu_custom_call.1} parent=5 // pred_region
        // Predicated region
        $region21: #{tpu_custom_call.1} parent=19 // pred_check
          %p156 = pneg %p74
        $region22: #{tpu_custom_call.1} parent=19 // pred_check_branch
          %158 = sbr.rel (%p156) target = $region24
        $region23: #{tpu_custom_call.1} parent=19 // pred_region
          %s159 = sand.u32 %s64, 1
          %s160 = scalar_lea.sflag [#allocation4], %s159
          %s161 = sand.u32 %s64, 1
          %s162 = smul.addr %s161, 16
          %s163 = scalar_lea.vmem [#allocation3], %s162
          %165 = vsyncadd %s160, 0
          %s166 = smul.addr %s27, 2
          %s167 = smul.addr %s26, 8
          %s168 = sadd.s32 %s166, %s167
          %s169 = smul.addr %s168, 8
          %s170 = scalar_lea.hbm %s1, %s169
          %s172 = sshll.u32 %s170, 4
          %s173 = int_to_ptr.hbm [resolvable:$true] %s172
          %s174 = sshll.u32 %s163, 4
          %s175 = int_to_ptr.vmem [resolvable:$true] %s174
          %177 = dma.hbm_to_vmem [thread:$0]  %s173, 256, %s175, %s160
        $region24: #{tpu_custom_call.1} parent=19 // pred_fallthru
          _
        // Predicated region
        $region25: #{tpu_custom_call.1} parent=19 // pred_check
          %p178 = pneg %p100
        $region26: #{tpu_custom_call.1} parent=19 // pred_check_branch
          %180 = sbr.rel (%p178) target = $region28
        $region27: #{tpu_custom_call.1} parent=19 // pred_region
          %s181 = sand.u32 %s90, 1
          %s182 = scalar_lea.sflag [#allocation7], %s181
          %s183 = sand.u32 %s90, 1
          %s184 = smul.addr %s183, 64
          %s185 = scalar_lea.vmem [#allocation6], %s184
          %187 = vsyncadd %s182, 0
          %s188 = smul.addr %s26, 8
          %s189 = smul.addr %s188, 8
          %s190 = scalar_lea.hbm %s2, %s189
          %s191 = sshll.u32 %s190, 4
          %s192 = int_to_ptr.hbm [resolvable:$true] %s191
          %s193 = sshll.u32 %s185, 4
          %s194 = int_to_ptr.vmem [resolvable:$true] %s193
          %199 = dma.hbm_to_vmem [thread:$0]  %s192, 1024, %s194, %s182, 256, 256, 16
        $region28: #{tpu_custom_call.1} parent=19 // pred_fallthru
          _
      $region20: #{tpu_custom_call.1} parent=5 // pred_fallthru
        _
      %p200 = scmp.le.s32.totalorder 1, %s19
      %p201 = scmp.lt.s32.totalorder %s19, 9
      %p202 = pnand %p200, %p201
      %p203 = pneg %p202
      // Predicated region
      $region29: #{tpu_custom_call.1} parent=5 // pred_check
        _
      $region30: #{tpu_custom_call.1} parent=5 // pred_check_branch
        %205 = sbr.rel (%p202) target = $region32
      $region31: #{tpu_custom_call.1} parent=5 // pred_region
        %s206 = ssub.s32 %s19, 1
        %s207 = sand.u32 %s67, 1
        %s208 = scalar_lea.sflag [#allocation4], %s207
        %s209 = sand.u32 %s67, 1
        %s210 = smul.addr %s209, 16
        %s211 = scalar_lea.vmem [#allocation3], %s210
        // Predicated region
        $region33: #{tpu_custom_call.1} parent=31 // pred_check
          %p212 = pneg %p80
        $region34: #{tpu_custom_call.1} parent=31 // pred_check_branch
          %214 = sbr.rel (%p212) target = $region36
        $region35: #{tpu_custom_call.1} parent=31 // pred_region
          %216 = dma.done %s208, 256
        $region36: #{tpu_custom_call.1} parent=31 // pred_fallthru
          _
        %s217 = sand.u32 %s93, 1
        %s218 = scalar_lea.sflag [#allocation7], %s217
        %s219 = sand.u32 %s93, 1
        %s220 = smul.addr %s219, 64
        %s221 = scalar_lea.vmem [#allocation6], %s220
        // Predicated region
        $region37: #{tpu_custom_call.1} parent=31 // pred_check
          %p222 = pneg %p106
        $region38: #{tpu_custom_call.1} parent=31 // pred_check_branch
          %224 = sbr.rel (%p222) target = $region40
        $region39: #{tpu_custom_call.1} parent=31 // pred_region
          %226 = dma.done %s218, 1024
        $region40: #{tpu_custom_call.1} parent=31 // pred_fallthru
          _
        %p227 = pneg %p52
        %p228 = pneg %p49
        %s229 = sand.u32 %s67, 1
        %s230 = scalar_lea.sflag [#allocation4], %s229
        %s231 = sand.u32 %s67, 1
        %s232 = smul.addr %s231, 16
        %s233 = scalar_lea.vmem [#allocation3], %s232
        %p234 = pneg %p80
        %p235 = pneg %p77
        %s236 = sand.u32 %s93, 1
        %s237 = scalar_lea.sflag [#allocation7], %s236
        %s238 = sand.u32 %s93, 1
        %s239 = smul.addr %s238, 64
        %s240 = scalar_lea.vmem [#allocation6], %s239
        %p241 = pneg %p106
        %p242 = pneg %p103
        %p243 = pneg %p134
        %p244 = pneg %p131
        %s245 = sand.u32 %s121, 1
        %s246 = scalar_lea.sflag [#allocation5], %s245
        %s247 = sand.u32 %s121, 1
        %s248 = smul.addr %s247, 16
        %s249 = scalar_lea.vmem [#allocation8], %s248
        %v250 = vld [vmem:[%s211] sm:$0xff]
        %v251 = vld [vmem:[%s211 + $0x8] sm:$0xff]
        %v252 = vld [vmem:[%s221] sm:$0xff]
        %v253 = vld [vmem:[%s221 + $0x8] sm:$0xff]
        %v254 = vld [vmem:[%s221 + $0x10] sm:$0xff]
        %v255 = vld [vmem:[%s221 + $0x18] sm:$0xff]
        %v256 = vld [vmem:[%s221 + $0x20] sm:$0xff]
        %v257 = vld [vmem:[%s221 + $0x28] sm:$0xff]
        %v258 = vld [vmem:[%s221 + $0x30] sm:$0xff]
        %v259 = vld [vmem:[%s221 + $0x38] sm:$0xff]
        %260 = vmatpush.xpose.msra.mxu0 0.0
        %261 = vmatpush.xpose.msra.mxu0 0.0
        %262 = vmatpush.xpose.msra.mxu0 0.0
        %263 = vmatpush.xpose.msra.mxu0 0.0
        %264 = vmatpush.xpose.msra.mxu0 0.0
        %265 = vmatpush.xpose.msra.mxu0 0.0
        %266 = vmatpush.xpose.msra.mxu0 0.0
        %267 = vmatpush.xpose.msra.mxu0 0.0
        %268 = vmatpush.xpose.msra.mxu0 0.0
        %269 = vmatpush.xpose.msra.mxu0 0.0
        %270 = vmatpush.xpose.msra.mxu0 0.0
        %271 = vmatpush.xpose.msra.mxu0 0.0
        %272 = vmatpush.xpose.msra.mxu0 %v258
        %273 = vmatpush.xpose.msra.mxu0 %v256
        %274 = vmatpush.xpose.msra.mxu0 %v254
        %275 = vmatpush.xpose.msra.mxu0 %v252
        %276 = vmatmul.f32.gmra.mxu0 %v250
        %v277 = vpop.f32.mrf.mxu0
        %v278 = vadd.f32 0.0, %v277
        %279 = vdwg.mxu0
        %280 = vmatpush.xpose.msra.mxu0 0.0
        %281 = vmatpush.xpose.msra.mxu0 0.0
        %282 = vmatpush.xpose.msra.mxu0 0.0
        %283 = vmatpush.xpose.msra.mxu0 0.0
        %284 = vmatpush.xpose.msra.mxu0 0.0
        %285 = vmatpush.xpose.msra.mxu0 0.0
        %286 = vmatpush.xpose.msra.mxu0 0.0
        %287 = vmatpush.xpose.msra.mxu0 0.0
        %288 = vmatpush.xpose.msra.mxu0 0.0
        %289 = vmatpush.xpose.msra.mxu0 0.0
        %290 = vmatpush.xpose.msra.mxu0 0.0
        %291 = vmatpush.xpose.msra.mxu0 0.0
        %292 = vmatpush.xpose.msra.mxu0 %v259
        %293 = vmatpush.xpose.msra.mxu0 %v257
        %294 = vmatpush.xpose.msra.mxu0 %v255
        %295 = vmatpush.xpose.msra.mxu0 %v253
        %296 = vmatmul.f32.gmra.mxu0 %v251
        %v297 = vpop.f32.mrf.mxu0
        %v298 = vadd.f32 %v278, %v297
        %299 = vdwg.mxu0
        %vm300 = vcmask 261120
        %v301 = vsel %vm300, %v298, inf
        %302 = vmin.xlane.f32.xlu0 %v301
        %v303 = vpop.xlane.xlu0 %302
        %v304 = vsub.f32 %v303, %v298
        %v305 = vmul.f32 %v304, 1.442695
        %v306 = vpow.pop %v305
        %v307 = vsel %vm300, %v306, 0.0
        %308 = vadd.xlane.f32.xlu0 %v307
        %v309 = vpop.xlane.xlu0 %308
        %v310 = vrcp.pop %v309
        %v311 = vmul.f32 %v309, %v310
        %v312 = vsub.f32 1.0, %v311
        %v313 = vmul.f32 %v310, %v312
        %v314 = vadd.f32 %v310, %v313
        %vm315 = vweird.f32 %v309
        %vm316 = vweird.f32 %v310
        %vm317 = vmor %vm315, %vm316
        %v318 = vsel %vm317, %v310, %v314
        %v319 = vand.u32 2147483647, %v309
        %vm320 = vcmp.eq.f32.partialorder %v319, 8.507059e+37
        %v321 = vand.u32 %v309, 2147483648
        %v322 = vor.u32 1.1754944e-38, %v321
        %v323 = vsel %vm320, %v322, %v318
        %v324 = vmul.f32 %v306, %v323
        %v326 = vsel %vm300, %v324, 0
        %328 = vmatpush.msra.mxu0 0.0
        %329 = vmatpush.msra.mxu0 0.0
        %330 = vmatpush.msra.mxu0 0.0
        %331 = vmatpush.msra.mxu0 0.0
        %332 = vmatpush.msra.mxu0 0.0
        %333 = vmatpush.msra.mxu0 0.0
        %334 = vmatpush.msra.mxu0 0.0
        %335 = vmatpush.msra.mxu0 0.0
        %336 = vmatpush.msra.mxu0 0.0
        %337 = vmatpush.msra.mxu0 0.0
        %338 = vmatpush.msra.mxu0 0.0
        %339 = vmatpush.msra.mxu0 0.0
        %340 = vmatpush.msra.mxu0 %v258
        %341 = vmatpush.msra.mxu0 %v256
        %342 = vmatpush.msra.mxu0 %v254
        %343 = vmatpush.msra.mxu0 %v252
        %344 = vmatmul.f32.gmra.mxu0 %v326
        %v345 = vpop.f32.mrf.mxu0
        %v346 = vadd.f32 0.0, %v345
        %347 = vdwg.mxu0
        %348 = vmatpush.msra.mxu0 0.0
        %349 = vmatpush.msra.mxu0 0.0
        %350 = vmatpush.msra.mxu0 0.0
        %351 = vmatpush.msra.mxu0 0.0
        %352 = vmatpush.msra.mxu0 0.0
        %353 = vmatpush.msra.mxu0 0.0
        %354 = vmatpush.msra.mxu0 0.0
        %355 = vmatpush.msra.mxu0 0.0
        %356 = vmatpush.msra.mxu0 0.0
        %357 = vmatpush.msra.mxu0 0.0
        %358 = vmatpush.msra.mxu0 0.0
        %359 = vmatpush.msra.mxu0 0.0
        %360 = vmatpush.msra.mxu0 %v259
        %361 = vmatpush.msra.mxu0 %v257
        %362 = vmatpush.msra.mxu0 %v255
        %363 = vmatpush.msra.mxu0 %v253
        %364 = vmatmul.f32.gmra.mxu0 %v326
        %v365 = vpop.f32.mrf.mxu0
        %v366 = vadd.f32 0.0, %v365
        %367 = vdwg.mxu0
        %s368 = sld [smem:[#allocation2]]
        %v369 = vstv %s368
        %v370 = vmul.f32 %v369, %v346
        %v371 = vmul.f32 %v369, %v366
        %v372 = vadd.f32 %v370, %v250
        %v373 = vadd.f32 %v371, %v251
        %374 = vst [vmem:[%s249] sm:$0xff] %v372
        %375 = vst [vmem:[%s249 + $0x8] sm:$0xff] %v373
        %s376 = sand.u32 %s121, 1
        %s377 = scalar_lea.sflag [#allocation5], %s376
        %s378 = sand.u32 %s121, 1
        %s379 = smul.addr %s378, 16
        %s380 = scalar_lea.vmem [#allocation8], %s379
        // Predicated region
        $region41: #{tpu_custom_call.1} parent=31 // pred_check
          %p381 = pneg %p131
        $region42: #{tpu_custom_call.1} parent=31 // pred_check_branch
          %383 = sbr.rel (%p381) target = $region44
        $region43: #{tpu_custom_call.1} parent=31 // pred_region
          %385 = vsyncadd %s377, 0
          %s386 = smul.addr %s29, 2
          %s387 = smul.addr %s28, 8
          %s388 = sadd.s32 %s386, %s387
          %s389 = smul.addr %s388, 8
          %s390 = scalar_lea.hbm %s3, %s389
          %s392 = sshll.u32 %s380, 4
          %s393 = int_to_ptr.vmem [resolvable:$true] %s392
          %s394 = sshll.u32 %s390, 4
          %s395 = int_to_ptr.hbm [resolvable:$true] %s394
          %397 = dma.vmem_to_hbm [thread:$0]  %s393, 256, %s395, %s377
        $region44: #{tpu_custom_call.1} parent=31 // pred_fallthru
          _
      $region32: #{tpu_custom_call.1} parent=5 // pred_fallthru
        _
      %p398 = scmp.le.s32.totalorder 2, %s19
      // Predicated region
      $region45: #{tpu_custom_call.1} parent=5 // pred_check
        %p399 = pneg %p398
      $region46: #{tpu_custom_call.1} parent=5 // pred_check_branch
        %401 = sbr.rel (%p399) target = $region48
      $region47: #{tpu_custom_call.1} parent=5 // pred_region
        %s402 = ssub.s32 %s19, 2
        // Predicated region
        $region49: #{tpu_custom_call.1} parent=47 // pred_check
          %p403 = pneg %p137
        $region50: #{tpu_custom_call.1} parent=47 // pred_check_branch
          %405 = sbr.rel (%p403) target = $region52
        $region51: #{tpu_custom_call.1} parent=47 // pred_region
          %s406 = sand.u32 %s122, 1
          %s407 = scalar_lea.sflag [#allocation5], %s406
          %s408 = sand.u32 %s122, 1
          %s409 = smul.addr %s408, 16
          %s410 = scalar_lea.vmem [#allocation8], %s409
          %412 = dma.done %s407, 256
        $region52: #{tpu_custom_call.1} parent=47 // pred_fallthru
          _
      $region48: #{tpu_custom_call.1} parent=5 // pred_fallthru
        _
    $region6: #{tpu_custom_call.1} parent=1 // loop_footer
      %s23 = sadd.s32 1, %s19
    $region7: #{tpu_custom_call.1} parent=1 // loop_footer_branch
      %18 = sbr.rel target = $region3
    $region8: #{tpu_custom_call.1} parent=1 // loop_exit
      _
    %413 = vsyncpa [#allocation4], 1
    %s414 = scalar_lea.sflag [#allocation4], 1
    %415 = vsyncpa %s414, 1
    %416 = vsyncpa [#allocation7], 1
    %s417 = scalar_lea.sflag [#allocation7], 1
    %418 = vsyncpa %s417, 1
    %419 = vsyncpa [#allocation5], 1
    %s420 = scalar_lea.sflag [#allocation5], 1
    %421 = vsyncpa %s420, 1

</llo_original>
